<compile_context>
chip_gen: v5e
topology: v5e:2x2
jax: 0.10.0
libtpu: 0.0.40
codegen_flags: <defaults>
</compile_context>

<pallas_src>
import jax
import jax.numpy as jnp
from jax.experimental import pallas as pl
from jax.experimental.pallas import tpu as pltpu

_LANE = 128
_VMEM_BUDGET = 40 << 20    # target per-step working set (safe under v7x's 64 MiB/TC)
_VMEM_CEILING = 64 << 20   # never request more scoped VMEM than v7x physically has


def _round_up(x: int, m: int) -> int:
    return ((x + m - 1) // m) * m


def _sublane_multiple(dtype) -> int:
    # Sub-32-bit dtypes pack rows along sublanes: 8 rows for 4B, 16 for 2B, 32 for 1B.
    return max(8, 32 // jnp.dtype(dtype).itemsize)


def _padded_block_bytes(rows: int, cols: int, dtype) -> int:
    # VMEM blocks are laid out in (tile_rows, 128) native 4-KiB tiles, so narrow last
    # dims lane-pad to 128 and short row counts sublane-pad.  Use this (not raw bytes)
    # for all VMEM accounting.
    itemsize = jnp.dtype(dtype).itemsize
    tile_rows = max(1, 32 // itemsize)
    return pl.cdiv(rows, tile_rows) * pl.cdiv(cols, _LANE) * 4096


def _mlp_kernel(x_ref, w1_ref, b1_ref, w2_ref, b2_ref, out_ref):
    # hidden = relu(x @ W1 + b1): MXU matmul, f32 accumulation, f32 bias add / ReLU.
    h = jnp.dot(x_ref[...], w1_ref[...], preferred_element_type=jnp.float32)
    h = jnp.maximum(h + b1_ref[...], 0.0)                       # (TB, H) + (1, H)
    # out = hidden @ W2 + b2 (cast hidden to the weight dtype so bf16 feeds the MXU).
    o = jnp.dot(h.astype(w2_ref.dtype), w2_ref[...],
                preferred_element_type=jnp.float32)
    out_ref[...] = (o + b2_ref[...]).astype(out_ref.dtype)      # real-bytes (TB, D_out) store


def mlp_forward(x, w1, b1, w2, b2, *, block_b: int = 4096, compute_dtype=None):
    """Fused MLP forward: relu(x @ w1 + b1) @ w2 + b2.

    x  : (B, D_in)
    w1 : (D_in, H),  b1 : (1, H) or (H,)
    w2 : (H, D_out), b2 : (1, D_out) or (D_out,)
    block_b       : target batch tile (rows per grid step); auto-clamped to the
                    packed-sublane multiple and shrunk to fit the VMEM budget.
    compute_dtype : optional dtype (e.g. jnp.bfloat16) for x/w1/w2 fed to the MXU.
                    Valid on all generations (v5e/v6e/v7x): MXU accumulates in f32 and
                    bias/ReLU stay f32.  Halves x/weight DMA bytes; hidden activation
                    is rounded to compute_dtype before the second matmul.
    returns (B, D_out) in x's original dtype.
    """
    B, D_in = x.shape
    H, D_out = w2.shape
    out_dtype = x.dtype

    if compute_dtype is not None:
        x = x.astype(compute_dtype)
        w1 = w1.astype(compute_dtype)
        w2 = w2.astype(compute_dtype)
    b1 = b1.astype(jnp.float32).reshape(1, H)
    b2 = b2.astype(jnp.float32).reshape(1, D_out)

    in_dtype = x.dtype
    w_dtype = w1.dtype
    sub = _sublane_multiple(in_dtype)

    # ---- weight residency check (constant index_map keeps them in VMEM) -----------
    # Count 2x each in case the pipeline double-buffers them anyway.
    w_bytes = 2 * (_padded_block_bytes(D_in, H, w_dtype)
                   + _padded_block_bytes(1, H, jnp.float32)
                   + _padded_block_bytes(H, D_out, w_dtype)
                   + _padded_block_bytes(1, D_out, jnp.float32))
    if w_bytes > _VMEM_BUDGET // 2:
        raise ValueError(
            "MLP weights too large to hold resident in VMEM for this kernel "
            f"({w_bytes} padded bytes); a feature-tiled fallback is not implemented.")

    # ---- batch tile selection ------------------------------------------------------
    block_b = max(_round_up(int(block_b), sub), sub)
    TB = min(block_b, _round_up(B, sub))
    nsteps = pl.cdiv(B, TB)
    if 1 < nsteps < 4:
        # Split a "few-tile" batch into >= 4 grid steps so both v7x TCs get work.
        TB = max(_round_up(pl.cdiv(B, 4), sub), sub)

    def step_bytes(tb):
        return (w_bytes
                + 2 * _padded_block_bytes(tb, D_in, in_dtype)    # streamed x, 2 buffers
                + 2 * _padded_block_bytes(tb, D_out, out_dtype)) # streamed out, 2 buffers

    while TB > sub and step_bytes(TB) > _VMEM_BUDGET:
        TB = max(_round_up(TB // 2, sub), sub)

    B_p = _round_up(B, TB)
    if B_p != B:
        x = jnp.pad(x, ((0, B_p - B), (0, 0)))

    vmem_limit = int(min(_VMEM_CEILING, max(step_bytes(TB) + (8 << 20), 32 << 20)))
    grid = (B_p // TB,)

    out = pl.pallas_call(
        _mlp_kernel,
        out_shape=jax.ShapeDtypeStruct((B_p, D_out), out_dtype),
        grid=grid,
        in_specs=[
            # Streamed per grid step (auto double-buffered).
            pl.BlockSpec((TB, D_in), lambda i: (i, 0)),
            # Weights / biases: constant index_map -> resident in VMEM across steps.
            pl.BlockSpec((D_in, H), lambda i: (0, 0)),
            pl.BlockSpec((1, H), lambda i: (0, 0)),
            pl.BlockSpec((H, D_out), lambda i: (0, 0)),
            pl.BlockSpec((1, D_out), lambda i: (0, 0)),
        ],
        out_specs=pl.BlockSpec((TB, D_out), lambda i: (i, 0)),
        compiler_params=pltpu.CompilerParams(
            dimension_semantics=("parallel",),   # batch axis shardable across v7x TCs
            vmem_limit_bytes=vmem_limit,
        ),
    )(x, w1, b1, w2, b2)

    return out[:B]


def init_mlp_params(key, input_dim, hidden_dim, output_dim, dtype=jnp.float32):
    """Deterministic init mimicking torch.nn.Linear (U(-1/sqrt(fan_in), +1/sqrt(fan_in)))."""
    k1, k2, k3, k4 = jax.random.split(key, 4)
    bound1 = 1.0 / jnp.sqrt(input_dim)
    bound2 = 1.0 / jnp.sqrt(hidden_dim)
    w1 = jax.random.uniform(k1, (input_dim, hidden_dim), dtype, -bound1, bound1)
    b1 = jax.random.uniform(k2, (1, hidden_dim), dtype, -bound1, bound1)
    w2 = jax.random.uniform(k3, (hidden_dim, output_dim), dtype, -bound2, bound2)
    b2 = jax.random.uniform(k4, (1, output_dim), dtype, -bound2, bound2)
    return w1, b1, w2, b2


def _ref_mlp(x, w1, b1, w2, b2):
    return jnp.maximum(x @ w1 + b1, 0.0) @ w2 + b2


if __name__ == "__main__":
    # MLPNet(input_dim=16, output_dim=8, hidden_dim=32, activation=nn.ReLU)
    B, D_IN, HIDDEN, D_OUT = 8, 16, 32, 8

    key = jax.random.PRNGKey(0)
    kx, kp = jax.random.split(key)
    x = jax.random.normal(kx, (B, D_IN), dtype=jnp.float32)
    w1, b1, w2, b2 = init_mlp_params(kp, D_IN, HIDDEN, D_OUT)
    ref = _ref_mlp(x, w1, b1, w2, b2)

    # 1) f32 path, single batch tile.
    out = mlp_forward(x, w1, b1, w2, b2)
    jax.block_until_ready(out)
    assert out.shape == (B, D_OUT)
    assert jnp.allclose(out, ref, atol=1e-5, rtol=1e-5)

    # 2) Multi-tile grid + ragged batch (exercises >=4-step split, batch padding,
    #    weight residency).
    B2 = 300
    x2 = jax.random.normal(jax.random.PRNGKey(1), (B2, D_IN), dtype=jnp.float32)
    out2 = mlp_forward(x2, w1, b1, w2, b2, block_b=128)
    jax.block_until_ready(out2)
    ref2 = _ref_mlp(x2, w1, b1, w2, b2)
    assert out2.shape == (B2, D_OUT)
    assert jnp.allclose(out2, ref2, atol=1e-5, rtol=1e-5)

    # 3) Larger batch with default (auto-sized) TB.
    B3 = 5000
    x3 = jax.random.normal(jax.random.PRNGKey(2), (B3, D_IN), dtype=jnp.float32)
    out3 = mlp_forward(x3, w1, b1, w2, b2)
    jax.block_until_ready(out3)
    ref3 = _ref_mlp(x3, w1, b1, w2, b2)
    assert out3.shape == (B3, D_OUT)
    assert jnp.allclose(out3, ref3, atol=1e-4, rtol=1e-4)

    # 4) bf16 MXU path (all generations incl. v5e): looser tolerance vs f32 reference.
    out_bf16 = mlp_forward(x, w1, b1, w2, b2, compute_dtype=jnp.bfloat16)
    jax.block_until_ready(out_bf16)
    assert jnp.allclose(out_bf16, ref, atol=5e-2, rtol=5e-2)

    print("KERNEL_OK")
</pallas_src>

<mosaic_0001>
module attributes {stable_mosaic.version = 11 : i64} {
  func.func @_mlp_kernel(%arg0: i32, %arg1: memref<8x16xf32, #tpu.memory_space<vmem>>, %arg2: memref<16x32xf32, #tpu.memory_space<vmem>>, %arg3: memref<1x32xf32, #tpu.memory_space<vmem>>, %arg4: memref<32x8xf32, #tpu.memory_space<vmem>>, %arg5: memref<1x8xf32, #tpu.memory_space<vmem>>, %arg6: memref<8x8xf32, #tpu.memory_space<vmem>>) attributes {dimension_semantics = [#tpu.dimension_semantics<parallel>], iteration_bounds = array<i64: 1>, scalar_prefetch = 0 : i64, scratch_operands = 0 : i64, tpu.core_type = #tpu.core_type<tc>, window_params = [{transform_indices = @transform_0, window_bounds = array<i64: 8, 16>}, {pipeline_mode = #tpu.pipeline_mode<synchronous>, transform_indices = @transform_1, window_bounds = array<i64: 16, 32>}, {pipeline_mode = #tpu.pipeline_mode<synchronous>, transform_indices = @transform_2, window_bounds = array<i64: 1, 32>}, {pipeline_mode = #tpu.pipeline_mode<synchronous>, transform_indices = @transform_3, window_bounds = array<i64: 32, 8>}, {pipeline_mode = #tpu.pipeline_mode<synchronous>, transform_indices = @transform_4, window_bounds = array<i64: 1, 8>}, {transform_indices = @transform_5, window_bounds = array<i64: 8, 8>}]} {
    %c0 = arith.constant 0 : index
    %c0_0 = arith.constant 0 : index
    %0 = vector.load %arg1[%c0, %c0_0] : memref<8x16xf32, #tpu.memory_space<vmem>>, vector<8x16xf32>
    %c0_1 = arith.constant 0 : index
    %c0_2 = arith.constant 0 : index
    %1 = vector.load %arg2[%c0_1, %c0_2] : memref<16x32xf32, #tpu.memory_space<vmem>>, vector<16x32xf32>
    %cst = arith.constant dense<0.000000e+00> : vector<8x32xf32>
    %2 = tpu.matmul %0, %1, %cst {dimension_numbers = #tpu.dot_dimension_numbers<[1], [0], [0], [1], [0, 0, 1, 1], [], []>} : vector<8x16xf32>, vector<16x32xf32>, vector<8x32xf32> -> vector<8x32xf32>
    %c0_3 = arith.constant 0 : index
    %c0_4 = arith.constant 0 : index
    %3 = vector.load %arg3[%c0_3, %c0_4] : memref<1x32xf32, #tpu.memory_space<vmem>>, vector<1x32xf32>
    %4 = vector.broadcast %3 : vector<1x32xf32> to vector<8x32xf32>
    %5 = arith.addf %2, %4 : vector<8x32xf32>
    %cst_5 = arith.constant 0.000000e+00 : f32
    %6 = vector.broadcast %cst_5 : f32 to vector<8x32xf32>
    %7 = arith.maximumf %5, %6 : vector<8x32xf32>
    %c0_6 = arith.constant 0 : index
    %c0_7 = arith.constant 0 : index
    %8 = vector.load %arg4[%c0_6, %c0_7] : memref<32x8xf32, #tpu.memory_space<vmem>>, vector<32x8xf32>
    %cst_8 = arith.constant dense<0.000000e+00> : vector<8x8xf32>
    %9 = tpu.matmul %7, %8, %cst_8 {dimension_numbers = #tpu.dot_dimension_numbers<[1], [0], [0], [1], [0, 0, 1, 1], [], []>} : vector<8x32xf32>, vector<32x8xf32>, vector<8x8xf32> -> vector<8x8xf32>
    %c0_9 = arith.constant 0 : index
    %c0_10 = arith.constant 0 : index
    %10 = vector.load %arg5[%c0_9, %c0_10] : memref<1x8xf32, #tpu.memory_space<vmem>>, vector<1x8xf32>
    %11 = vector.broadcast %10 : vector<1x8xf32> to vector<8x8xf32>
    %12 = arith.addf %9, %11 : vector<8x8xf32>
    %c0_11 = arith.constant 0 : index
    %c0_12 = arith.constant 0 : index
    %13 = vector.load %arg6[%c0_11, %c0_12] : memref<8x8xf32, #tpu.memory_space<vmem>>, vector<8x8xf32>
    tpu.vector_store %arg6[%c0_11, %c0_12], %12 {strides = array<i32>} : memref<8x8xf32, #tpu.memory_space<vmem>>, vector<8x8xf32>,
    return
  }
  func.func @transform_0(%arg0: i32) -> (i32, i32) {
    %c0_i32 = arith.constant 0 : i32
    %c0_i32_0 = arith.constant 0 : i32
    return %arg0, %c0_i32 : i32, i32
  }
  func.func @transform_1(%arg0: i32) -> (i32, i32) {
    %c0_i32 = arith.constant 0 : i32
    %c0_i32_0 = arith.constant 0 : i32
    %c0_i32_1 = arith.constant 0 : i32
    return %c0_i32, %c0_i32_0 : i32, i32
  }
  func.func @transform_2(%arg0: i32) -> (i32, i32) {
    %c0_i32 = arith.constant 0 : i32
    %c0_i32_0 = arith.constant 0 : i32
    %c0_i32_1 = arith.constant 0 : i32
    return %c0_i32, %c0_i32_0 : i32, i32
  }
  func.func @transform_3(%arg0: i32) -> (i32, i32) {
    %c0_i32 = arith.constant 0 : i32
    %c0_i32_0 = arith.constant 0 : i32
    %c0_i32_1 = arith.constant 0 : i32
    return %c0_i32, %c0_i32_0 : i32, i32
  }
  func.func @transform_4(%arg0: i32) -> (i32, i32) {
    %c0_i32 = arith.constant 0 : i32
    %c0_i32_0 = arith.constant 0 : i32
    %c0_i32_1 = arith.constant 0 : i32
    return %c0_i32, %c0_i32_0 : i32, i32
  }
  func.func @transform_5(%arg0: i32) -> (i32, i32) {
    %c0_i32 = arith.constant 0 : i32
    %c0_i32_0 = arith.constant 0 : i32
    return %arg0, %c0_i32 : i32, i32
  }
}

</mosaic_0001>

<llo_original>
// kernel: tpu_custom_call.1
$region0: #{tpu_custom_call.1}
  #allocation0 [shape = 'u32[]', space=smem, size = 0x4, offset = 0x4, fixed_abs, tag = 'smem constant byte address 0x4 - core index']
  #allocation1 [shape = 'u32[72,128]{1,0:T(1,128)}', space=vmem, size = 0x9000, scoped, tag = 'internal scratch']
  %s0 = inlined_call_operand.vmem [shape: f32[8,16], index: 0, kind: input, shape index: {}]
  %s1 = inlined_call_operand.vmem [shape: f32[16,32], index: 1, kind: input, shape index: {}]
  %s2 = inlined_call_operand.vmem [shape: f32[1,32], index: 2, kind: input, shape index: {}]
  %s3 = inlined_call_operand.vmem [shape: f32[32,8], index: 3, kind: input, shape index: {}]
  %s4 = inlined_call_operand.vmem [shape: f32[1,8], index: 4, kind: input, shape index: {}]
  %s5 = inlined_call_operand.hbm [shape: f32[8,8], index: 5, kind: output, shape index: {}]
  %s6 = sld [smem:[#allocation0]]
  $region30: #{tpu_custom_call.1} parent=0
    _
  %s8 = ssub.s32 1, %s6
  %s9 = scalar_select 0, %s8, %s6
  $region1: #{tpu_custom_call.1} parent=0
    #allocation2 [shape = 'u8[4096]{0}', space=vmem, size = 0x1000, scoped, tag = 'output window, operand 0, single buffered']
    #allocation3 [shape = 's32[1]{0}', space=sflag, size = 0x4, scoped, tag = 'scoped memory for tpu_custom_call.1']
    %10 = vsyncpa [#allocation3], 0
    // Predicated region
    $region2: #{tpu_custom_call.1} parent=1 // pred_check
      _
    $region3: #{tpu_custom_call.1} parent=1 // pred_check_branch
      %12 = sbr.rel (0) target = $region5
    $region4: #{tpu_custom_call.1} parent=1 // pred_region
      _
    $region5: #{tpu_custom_call.1} parent=1 // pred_fallthru
      _
    // Predicated region
    $region6: #{tpu_custom_call.1} parent=1 // pred_check
      _
    $region7: #{tpu_custom_call.1} parent=1 // pred_check_branch
      %14 = sbr.rel (0) target = $region9
    $region8: #{tpu_custom_call.1} parent=1 // pred_region
      _
    $region9: #{tpu_custom_call.1} parent=1 // pred_fallthru
      _
    // Predicated region
    $region10: #{tpu_custom_call.1} parent=1 // pred_check
      _
    $region11: #{tpu_custom_call.1} parent=1 // pred_check_branch
      %16 = sbr.rel (0) target = $region13
    $region12: #{tpu_custom_call.1} parent=1 // pred_region
      _
    $region13: #{tpu_custom_call.1} parent=1 // pred_fallthru
      _
    // Predicated region
    $region14: #{tpu_custom_call.1} parent=1 // pred_check
      _
    $region15: #{tpu_custom_call.1} parent=1 // pred_check_branch
      %18 = sbr.rel (0) target = $region17
    $region16: #{tpu_custom_call.1} parent=1 // pred_region
      _
    $region17: #{tpu_custom_call.1} parent=1 // pred_fallthru
      _
    // Predicated region
    $region18: #{tpu_custom_call.1} parent=1 // pred_check
      _
    $region19: #{tpu_custom_call.1} parent=1 // pred_check_branch
      %20 = sbr.rel (0) target = $region21
    $region20: #{tpu_custom_call.1} parent=1 // pred_region
      _
    $region21: #{tpu_custom_call.1} parent=1 // pred_fallthru
      _
    %v21 = vld [vmem:[%s0] sm:$0xff]
    %v22 = vld [vmem:[%s1] sm:$0xff]
    %v23 = vld [vmem:[%s1 + $0x8] sm:$0xff]
    %v24 = vld [vmem:[%s2] sm:$0x1]
    %v26 = vperm.slane %v24, 0
    %vm28 = vcmask 130048
    %v30 = vsel %vm28, %v21, 0
    %32 = vmatpush.msra.mxu0 0.0
    %33 = vmatpush.msra.mxu0 0.0
    %34 = vmatpush.msra.mxu0 0.0
    %35 = vmatpush.msra.mxu0 0.0
    %36 = vmatpush.msra.mxu0 0.0
    %37 = vmatpush.msra.mxu0 0.0
    %38 = vmatpush.msra.mxu0 0.0
    %39 = vmatpush.msra.mxu0 0.0
    %40 = vmatpush.msra.mxu0 0.0
    %41 = vmatpush.msra.mxu0 0.0
    %42 = vmatpush.msra.mxu0 0.0
    %43 = vmatpush.msra.mxu0 0.0
    %44 = vmatpush.msra.mxu0 0.0
    %45 = vmatpush.msra.mxu0 0.0
    %46 = vmatpush.msra.mxu0 %v23
    %47 = vmatpush.msra.mxu0 %v22
    %48 = vmatmul.f32.gmra.mxu0 %v30
    %v49 = vpop.f32.mrf.mxu0
    %v50 = vadd.f32 %v26, %v49
    %51 = vdwg.mxu0
    %v52 = vmax.f32 %v50, 0.0
    %v53 = vld [vmem:[%s3] sm:$0xff]
    %v54 = vld [vmem:[%s3 + $0x8] sm:$0xff]
    %v55 = vld [vmem:[%s3 + $0x10] sm:$0xff]
    %v56 = vld [vmem:[%s3 + $0x18] sm:$0xff]
    %v57 = vld [vmem:[%s4] sm:$0x1]
    %v59 = vperm.slane %v57, 0
    %vm61 = vcmask 261120
    %v63 = vsel %vm61, %v52, 0
    %65 = vmatpush.msra.mxu0 0.0
    %66 = vmatpush.msra.mxu0 0.0
    %67 = vmatpush.msra.mxu0 0.0
    %68 = vmatpush.msra.mxu0 0.0
    %69 = vmatpush.msra.mxu0 0.0
    %70 = vmatpush.msra.mxu0 0.0
    %71 = vmatpush.msra.mxu0 0.0
    %72 = vmatpush.msra.mxu0 0.0
    %73 = vmatpush.msra.mxu0 0.0
    %74 = vmatpush.msra.mxu0 0.0
    %75 = vmatpush.msra.mxu0 0.0
    %76 = vmatpush.msra.mxu0 0.0
    %77 = vmatpush.msra.mxu0 %v56
    %78 = vmatpush.msra.mxu0 %v55
    %79 = vmatpush.msra.mxu0 %v54
    %80 = vmatpush.msra.mxu0 %v53
    %81 = vmatmul.f32.gmra.mxu0 %v63
    %v82 = vpop.f32.mrf.mxu0
    %v83 = vadd.f32 %v59, %v82
    %84 = vdwg.mxu0
    %vm85 = vcmask 64512
    %86 = vst.msk [vmem:[#allocation2] sm:$0xff] %vm85, %v83
    // Predicated region
    $region22: #{tpu_custom_call.1} parent=1 // pred_check
      _
    $region23: #{tpu_custom_call.1} parent=1 // pred_check_branch
      %88 = sbr.rel (0) target = $region25
    $region24: #{tpu_custom_call.1} parent=1 // pred_region
      %90 = vsyncadd [#allocation3], 0
      %s92 = sshll.u32 [#allocation2], 4
      %s93 = int_to_ptr.vmem [resolvable:$true] %s92
      %s94 = sshll.u32 %s5, 4
      %s95 = int_to_ptr.hbm [resolvable:$true] %s94
      %97 = dma.vmem_to_hbm [thread:$0]  %s93, 128, %s95, [#allocation3]
    $region25: #{tpu_custom_call.1} parent=1 // pred_fallthru
      _
    // Predicated region
    $region26: #{tpu_custom_call.1} parent=1 // pred_check
      _
    $region27: #{tpu_custom_call.1} parent=1 // pred_check_branch
      %99 = sbr.rel (0) target = $region29
    $region28: #{tpu_custom_call.1} parent=1 // pred_region
      %101 = dma.done [#allocation3], 128
    $region29: #{tpu_custom_call.1} parent=1 // pred_fallthru
      _
    %102 = vsyncpa [#allocation3], 1

</llo_original>
